<compile_context>
chip_gen: v7x
topology: tpu7x:2x2x1
jax: 0.10.0
libtpu: 0.0.40
codegen_flags: <defaults>
</compile_context>

<pallas_src>
import functools

import jax
import jax.numpy as jnp
from jax.experimental import pallas as pl
from jax.experimental.pallas import tpu as pltpu


def _round_up(n, m):
    return ((n + m - 1) // m) * m


def vanet_kernel(x_ref, w1_ref, b1_ref, wht_ref, bht_ref, qt_ref, *,
                 action_dim, compute_dtype):
    # Shared trunk: fc1 + ReLU.  PyTorch evaluates fc1 twice with identical
    # results, so compute it once.
    x = x_ref[...]                                                    # (TB, S)
    h = jnp.dot(x, w1_ref[...], preferred_element_type=jnp.float32)
    h = jnp.maximum(h + b1_ref[...], 0.0)                             # (TB, H) f32
    h = h.astype(compute_dtype)                                       # MXU operand dtype

    # Fused Advantage|Value head, transposed (batch on lanes):
    #   rows [0, A) = A-head, row A = V-head, rows (A, HEAD_PAD) = zeros.
    # av_t = Wh_t @ h^T  -> (HEAD_PAD, TB), f32 accumulation on the MXU.
    av = jax.lax.dot_general(
        wht_ref[...], h,
        dimension_numbers=(((1,), (1,)), ((), ())),
        preferred_element_type=jnp.float32)
    av = av + bht_ref[...]                                            # (HEAD_PAD, TB) f32

    # Full-width masked sublane reductions (no partial-lane/sublane slices):
    # mean(A) and V come from where+sum over the head axis (XLU slot).
    head_pad = av.shape[0]
    row = jax.lax.broadcasted_iota(jnp.int32, (head_pad, 1), 0)
    a_sum = jnp.sum(jnp.where(row < action_dim, av, 0.0), axis=0, keepdims=True)
    v = jnp.sum(jnp.where(row == action_dim, av, 0.0), axis=0, keepdims=True)

    # Q = V + A - mean(A), stored lane-dense as (HEAD_PAD, TB); padded head
    # rows hold garbage that the wrapper slices away.
    qt_ref[...] = av + (v - a_sum * (1.0 / action_dim))


def prepare_params(params, *, compute_dtype=jnp.bfloat16):
    """One-time parameter prep: fuse the A/V heads and cast MXU operands.

    Hoisted out of the per-call path so the wrapper does no weight scatter /
    cast work per forward call.
    """
    w1, b1, wa, ba, wv, bv = params
    H = w1.shape[1]
    A = wa.shape[1]
    head_pad = _round_up(A + 1, 8)                    # sublane-aligned head rows

    wht = jnp.zeros((head_pad, H), jnp.float32)
    wht = wht.at[:A, :].set(wa.T).at[A, :].set(wv[:, 0])
    bht = jnp.zeros((head_pad, 1), jnp.float32)
    bht = bht.at[:A, 0].set(ba[0]).at[A, 0].set(bv[0, 0])

    return dict(
        w1=w1.astype(compute_dtype),                  # MXU operand
        b1=b1.astype(jnp.float32),                    # bias stays f32 (VPU)
        wht=wht.astype(compute_dtype),                # fused head, MXU operand
        bht=bht,                                      # fused head bias, f32
        state_dim=w1.shape[0],
        hidden_dim=H,
        action_dim=A,
        head_pad=head_pad,
        compute_dtype=compute_dtype,
    )


def vanet_forward(x, prep, *, block_b=512, interpret=False):
    B, S = x.shape
    H = prep["hidden_dim"]
    A = prep["action_dim"]
    head_pad = prep["head_pad"]
    compute_dtype = prep["compute_dtype"]

    # Adaptive batch tiling: single sublane-aligned tile for small batches;
    # otherwise size the tile from cdiv(B, steps) rounded to 128 (output lane
    # constraint) so pad waste stays small.  Batch axis is "parallel" so v7x's
    # two TensorCores split the grid (a 3-step grid splits 2:1 — still better
    # than idling one core).
    if B <= block_b:
        tb = _round_up(max(B, 1), 8)
        n_steps = 1
    else:
        n_steps = pl.cdiv(B, block_b)
        tb = _round_up(pl.cdiv(B, n_steps), 128)
        n_steps = pl.cdiv(B, tb)
    b_pad = tb * n_steps
    if b_pad != B:
        x = jnp.pad(x, ((0, b_pad - B), (0, 0)))
    x_c = x.astype(compute_dtype)

    kernel = functools.partial(vanet_kernel, action_dim=A,
                               compute_dtype=compute_dtype)

    itemsize = jnp.dtype(compute_dtype).itemsize
    cost = pl.CostEstimate(
        flops=2 * b_pad * (S * H + H * head_pad),
        transcendentals=0,
        bytes_accessed=(b_pad * S * itemsize            # x
                        + S * H * itemsize              # W1
                        + head_pad * H * itemsize       # fused head W
                        + (H + head_pad) * 4            # biases
                        + head_pad * b_pad * 4),        # Q writeback
    )

    # NOTE: weights are grid-invariant whole blocks; at larger S/H on v7x
    # (64 MiB VMEM) add vmem_limit_bytes / an H-tiling "arbitrary" axis.
    qt_pad = pl.pallas_call(
        kernel,
        out_shape=jax.ShapeDtypeStruct((head_pad, b_pad), jnp.float32),
        grid=(n_steps,),
        in_specs=[
            pl.BlockSpec((tb, S), lambda i: (i, 0)),          # x: tiled batch
            pl.BlockSpec((S, H), lambda i: (0, 0)),           # W1 (grid-invariant)
            pl.BlockSpec((1, H), lambda i: (0, 0)),           # b1
            pl.BlockSpec((head_pad, H), lambda i: (0, 0)),    # fused head W (A|V|0)
            pl.BlockSpec((head_pad, 1), lambda i: (0, 0)),    # fused head b
        ],
        out_specs=pl.BlockSpec((head_pad, tb), lambda i: (0, i)),
        compiler_params=pltpu.CompilerParams(
            dimension_semantics=("parallel",),
        ),
        cost_estimate=cost,
        interpret=interpret,
    )(x_c, prep["w1"], prep["b1"], prep["wht"], prep["bht"])

    # Only the tiny (A, B) corner is real data; transpose back to (B, A).
    return qt_pad[:A, :B].T


def init_params(key, state_dim, hidden_dim, action_dim):
    # Deterministic init mimicking torch.nn.Linear's U(-1/sqrt(fan_in), ...).
    ks = jax.random.split(key, 6)

    def lin(kw, kb, fan_in, fan_out):
        bound = 1.0 / jnp.sqrt(fan_in)
        w = jax.random.uniform(kw, (fan_in, fan_out), jnp.float32, -bound, bound)
        b = jax.random.uniform(kb, (1, fan_out), jnp.float32, -bound, bound)
        return w, b

    w1, b1 = lin(ks[0], ks[1], state_dim, hidden_dim)
    wa, ba = lin(ks[2], ks[3], hidden_dim, action_dim)
    wv, bv = lin(ks[4], ks[5], hidden_dim, 1)
    return (w1, b1, wa, ba, wv, bv)


def vanet_reference(x, params):
    w1, b1, wa, ba, wv, bv = params
    h = jnp.maximum(x @ w1 + b1, 0.0)
    a = h @ wa + ba
    v = h @ wv + bv
    return v + a - jnp.mean(a, axis=-1, keepdims=True)


if __name__ == "__main__":
    B, STATE, HIDDEN, ACTION = 4, 16, 32, 8
    key = jax.random.PRNGKey(0)
    kx, kp = jax.random.split(key)
    x = jax.random.normal(kx, (B, STATE), jnp.float32)
    params = init_params(kp, STATE, HIDDEN, ACTION)
    q_ref = vanet_reference(x, params)

    # --- f32 compute path: bit-tight vs reference ---
    prep_f32 = prepare_params(params, compute_dtype=jnp.float32)
    q = jax.block_until_ready(vanet_forward(x, prep_f32))
    assert q.shape == (B, ACTION)
    assert jnp.allclose(q, q_ref, atol=1e-5, rtol=1e-5), "mismatch vs reference"

    # --- multi-tile grid with a ragged batch (exercises adaptive tiling) ---
    x_big = jax.random.normal(kx, (1037, STATE), jnp.float32)
    q_big = jax.block_until_ready(vanet_forward(x_big, prep_f32))
    q_big_ref = vanet_reference(x_big, params)
    assert q_big.shape == (1037, ACTION)
    assert jnp.allclose(q_big, q_big_ref, atol=1e-4, rtol=1e-4), "big-batch mismatch"

    # --- bf16 MXU-operand path (f32 accumulation/epilogue), relaxed tol ---
    prep_bf16 = prepare_params(params, compute_dtype=jnp.bfloat16)
    q_bf16 = jax.block_until_ready(vanet_forward(x, prep_bf16))
    assert q_bf16.shape == (B, ACTION)
    assert jnp.allclose(q_bf16, q_ref, atol=5e-2, rtol=5e-2), "bf16 path mismatch"

    print("KERNEL_OK")
</pallas_src>

<mosaic_0001>
module attributes {stable_mosaic.version = 11 : i64} {
  func.func @vanet_kernel(%arg0: i32, %arg1: memref<8x16xf32, #tpu.memory_space<vmem>>, %arg2: memref<16x32xf32, #tpu.memory_space<vmem>>, %arg3: memref<1x32xf32, #tpu.memory_space<vmem>>, %arg4: memref<16x32xf32, #tpu.memory_space<vmem>>, %arg5: memref<16x1xf32, #tpu.memory_space<vmem>>, %arg6: memref<16x8xf32, #tpu.memory_space<vmem>>) attributes {dimension_semantics = [#tpu.dimension_semantics<parallel>], iteration_bounds = array<i64: 1>, scalar_prefetch = 0 : i64, scratch_operands = 0 : i64, tpu.core_type = #tpu.core_type<tc>, window_params = [{transform_indices = @transform_0, window_bounds = array<i64: 8, 16>}, {pipeline_mode = #tpu.pipeline_mode<synchronous>, transform_indices = @transform_1, window_bounds = array<i64: 16, 32>}, {pipeline_mode = #tpu.pipeline_mode<synchronous>, transform_indices = @transform_2, window_bounds = array<i64: 1, 32>}, {pipeline_mode = #tpu.pipeline_mode<synchronous>, transform_indices = @transform_3, window_bounds = array<i64: 16, 32>}, {pipeline_mode = #tpu.pipeline_mode<synchronous>, transform_indices = @transform_4, window_bounds = array<i64: 16, 1>}, {transform_indices = @transform_5, window_bounds = array<i64: 16, 8>}]} {
    %c0 = arith.constant 0 : index
    %c0_0 = arith.constant 0 : index
    %0 = vector.load %arg1[%c0, %c0_0] : memref<8x16xf32, #tpu.memory_space<vmem>>, vector<8x16xf32>
    %c0_1 = arith.constant 0 : index
    %c0_2 = arith.constant 0 : index
    %1 = vector.load %arg2[%c0_1, %c0_2] : memref<16x32xf32, #tpu.memory_space<vmem>>, vector<16x32xf32>
    %cst = arith.constant dense<0.000000e+00> : vector<8x32xf32>
    %2 = tpu.matmul %0, %1, %cst {dimension_numbers = #tpu.dot_dimension_numbers<[1], [0], [0], [1], [0, 0, 1, 1], [], []>} : vector<8x16xf32>, vector<16x32xf32>, vector<8x32xf32> -> vector<8x32xf32>
    %c0_3 = arith.constant 0 : index
    %c0_4 = arith.constant 0 : index
    %3 = vector.load %arg3[%c0_3, %c0_4] : memref<1x32xf32, #tpu.memory_space<vmem>>, vector<1x32xf32>
    %4 = vector.broadcast %3 : vector<1x32xf32> to vector<8x32xf32>
    %5 = arith.addf %2, %4 : vector<8x32xf32>
    %cst_5 = arith.constant 0.000000e+00 : f32
    %6 = vector.broadcast %cst_5 : f32 to vector<8x32xf32>
    %7 = arith.maximumf %5, %6 : vector<8x32xf32>
    %c0_6 = arith.constant 0 : index
    %c0_7 = arith.constant 0 : index
    %8 = vector.load %arg4[%c0_6, %c0_7] : memref<16x32xf32, #tpu.memory_space<vmem>>, vector<16x32xf32>
    %cst_8 = arith.constant dense<0.000000e+00> : vector<16x8xf32>
    %9 = tpu.matmul %8, %7, %cst_8 {dimension_numbers = #tpu.dot_dimension_numbers<[1], [1], [0], [0], [0, 0, 1, 0], [], []>} : vector<16x32xf32>, vector<8x32xf32>, vector<16x8xf32> -> vector<16x8xf32>
    %c0_9 = arith.constant 0 : index
    %c0_10 = arith.constant 0 : index
    %10 = vector.load %arg5[%c0_9, %c0_10] : memref<16x1xf32, #tpu.memory_space<vmem>>, vector<16x1xf32>
    %11 = vector.broadcast %10 : vector<16x1xf32> to vector<16x8xf32>
    %12 = arith.addf %9, %11 : vector<16x8xf32>
    %13 = tpu.iota {dimensions = array<i32: 0>} : vector<16x1xi32>
    %c8_i32 = arith.constant 8 : i32
    %14 = vector.broadcast %c8_i32 : i32 to vector<16x1xi32>
    %15 = arith.cmpi slt, %13, %14 : vector<16x1xi32>
    %cst_11 = arith.constant 0.000000e+00 : f32
    %16 = vector.shape_cast %15 : vector<16x1xi1> to vector<16x1xi1>
    %17 = vector.broadcast %16 : vector<16x1xi1> to vector<16x8xi1>
    %18 = vector.broadcast %cst_11 : f32 to vector<16x8xf32>
    %19 = arith.select %17, %12, %18 : vector<16x8xi1>, vector<16x8xf32>
    %cst_12 = arith.constant dense<0.000000e+00> : vector<8xf32>
    %20 = vector.multi_reduction <add>, %19, %cst_12 [0] : vector<16x8xf32> to vector<8xf32>
    %21 = vector.shape_cast %20 : vector<8xf32> to vector<1x8xf32>
    %c8_i32_13 = arith.constant 8 : i32
    %22 = vector.broadcast %c8_i32_13 : i32 to vector<16x1xi32>
    %23 = arith.cmpi eq, %13, %22 : vector<16x1xi32>
    %cst_14 = arith.constant 0.000000e+00 : f32
    %24 = vector.shape_cast %23 : vector<16x1xi1> to vector<16x1xi1>
    %25 = vector.broadcast %24 : vector<16x1xi1> to vector<16x8xi1>
    %26 = vector.broadcast %cst_14 : f32 to vector<16x8xf32>
    %27 = arith.select %25, %12, %26 : vector<16x8xi1>, vector<16x8xf32>
    %cst_15 = arith.constant dense<0.000000e+00> : vector<8xf32>
    %28 = vector.multi_reduction <add>, %27, %cst_15 [0] : vector<16x8xf32> to vector<8xf32>
    %29 = vector.shape_cast %28 : vector<8xf32> to vector<1x8xf32>
    %cst_16 = arith.constant 1.250000e-01 : f32
    %30 = vector.broadcast %cst_16 : f32 to vector<1x8xf32>
    %31 = arith.mulf %21, %30 : vector<1x8xf32>
    %32 = arith.subf %29, %31 : vector<1x8xf32>
    %33 = vector.broadcast %32 : vector<1x8xf32> to vector<16x8xf32>
    %34 = arith.addf %12, %33 : vector<16x8xf32>
    %c0_17 = arith.constant 0 : index
    %c0_18 = arith.constant 0 : index
    %35 = vector.load %arg6[%c0_17, %c0_18] : memref<16x8xf32, #tpu.memory_space<vmem>>, vector<16x8xf32>
    tpu.vector_store %arg6[%c0_17, %c0_18], %34 {strides = array<i32>} : memref<16x8xf32, #tpu.memory_space<vmem>>, vector<16x8xf32>,
    return
  }
  func.func @transform_0(%arg0: i32) -> (i32, i32) {
    %c0_i32 = arith.constant 0 : i32
    %c0_i32_0 = arith.constant 0 : i32
    return %arg0, %c0_i32 : i32, i32
  }
  func.func @transform_1(%arg0: i32) -> (i32, i32) {
    %c0_i32 = arith.constant 0 : i32
    %c0_i32_0 = arith.constant 0 : i32
    %c0_i32_1 = arith.constant 0 : i32
    return %c0_i32, %c0_i32_0 : i32, i32
  }
  func.func @transform_2(%arg0: i32) -> (i32, i32) {
    %c0_i32 = arith.constant 0 : i32
    %c0_i32_0 = arith.constant 0 : i32
    %c0_i32_1 = arith.constant 0 : i32
    return %c0_i32, %c0_i32_0 : i32, i32
  }
  func.func @transform_3(%arg0: i32) -> (i32, i32) {
    %c0_i32 = arith.constant 0 : i32
    %c0_i32_0 = arith.constant 0 : i32
    %c0_i32_1 = arith.constant 0 : i32
    return %c0_i32, %c0_i32_0 : i32, i32
  }
  func.func @transform_4(%arg0: i32) -> (i32, i32) {
    %c0_i32 = arith.constant 0 : i32
    %c0_i32_0 = arith.constant 0 : i32
    %c0_i32_1 = arith.constant 0 : i32
    return %c0_i32, %c0_i32_0 : i32, i32
  }
  func.func @transform_5(%arg0: i32) -> (i32, i32) {
    %c0_i32 = arith.constant 0 : i32
    %c0_i32_0 = arith.constant 0 : i32
    return %c0_i32, %arg0 : i32, i32
  }
}

</mosaic_0001>

<llo_original>
// kernel: tpu_custom_call.1
$region0: #{tpu_custom_call.1}
  #allocation0 [shape = 'u32[]', space=smem, size = 0x4, offset = 0x4, fixed_abs, tag = 'smem constant byte address 0x4 - core index']
  #allocation1 [shape = 'u32[144,128]{1,0:T(1,128)}', space=vmem, size = 0x12000, scoped, tag = 'internal scratch']
  %s0 = inlined_call_operand.hbm [shape: f32[8,16], index: 0, kind: input, shape index: {}]
  %s1 = inlined_call_operand.vmem [shape: f32[16,32], index: 1, kind: input, shape index: {}]
  %s2 = inlined_call_operand.vmem [shape: f32[1,32], index: 2, kind: input, shape index: {}]
  %s3 = inlined_call_operand.hbm [shape: f32[16,32], index: 3, kind: input, shape index: {}]
  %s4 = inlined_call_operand.vmem [shape: f32[16,1], index: 4, kind: input, shape index: {}]
  %s5 = inlined_call_operand.vmem [shape: f32[16,8], index: 5, kind: output, shape index: {}]
  %s6 = sld [smem:[#allocation0]]
  $region38: #{tpu_custom_call.1} parent=0
    _
  %s8 = ssub.s32 1, %s6
  %s9 = scalar_select 0, %s8, %s6
  $region1: #{tpu_custom_call.1} parent=0
    #allocation2 [shape = 'u8[4096]{0}', space=vmem, size = 0x1000, scoped, tag = 'input window, operand 0, single buffered']
    #allocation3 [shape = 's32[1]{0}', space=sflag, size = 0x4, scoped, tag = 'scoped memory for tpu_custom_call.1']
    #allocation4 [shape = 'u8[8192]{0}', space=vmem, size = 0x2000, scoped, tag = 'input window, operand 3, single buffered']
    #allocation5 [shape = 's32[1]{0}', space=sflag, size = 0x4, scoped, tag = 'scoped memory for tpu_custom_call.1']
    %10 = vsyncpa [#allocation3], 0
    %11 = vsyncpa [#allocation5], 0
    // Predicated region
    $region2: #{tpu_custom_call.1} parent=1 // pred_check
      _
    $region3: #{tpu_custom_call.1} parent=1 // pred_check_branch
      %13 = sbr.rel (0) target = $region5
    $region4: #{tpu_custom_call.1} parent=1 // pred_region
      %s15 = ssub.s32 128, 128
      %16 = vsyncadd [#allocation3], %s15
      %s18 = sshll.u32 [#allocation2], 4
      %s19 = int_to_ptr.vmem [resolvable:$true] %s18
      %21 = dma.hbm_to_vmem [thread:$0]  %s0, 128, %s19, [#allocation3]
    $region5: #{tpu_custom_call.1} parent=1 // pred_fallthru
      _
    // Predicated region
    $region6: #{tpu_custom_call.1} parent=1 // pred_check
      _
    $region7: #{tpu_custom_call.1} parent=1 // pred_check_branch
      %23 = sbr.rel (0) target = $region9
    $region8: #{tpu_custom_call.1} parent=1 // pred_region
      _
    $region9: #{tpu_custom_call.1} parent=1 // pred_fallthru
      _
    // Predicated region
    $region10: #{tpu_custom_call.1} parent=1 // pred_check
      _
    $region11: #{tpu_custom_call.1} parent=1 // pred_check_branch
      %25 = sbr.rel (0) target = $region13
    $region12: #{tpu_custom_call.1} parent=1 // pred_region
      _
    $region13: #{tpu_custom_call.1} parent=1 // pred_fallthru
      _
    // Predicated region
    $region14: #{tpu_custom_call.1} parent=1 // pred_check
      _
    $region15: #{tpu_custom_call.1} parent=1 // pred_check_branch
      %27 = sbr.rel (0) target = $region17
    $region16: #{tpu_custom_call.1} parent=1 // pred_region
      %s29 = ssub.s32 256, 256
      %30 = vsyncadd [#allocation5], %s29
      %s31 = sshll.u32 [#allocation4], 4
      %s32 = int_to_ptr.vmem [resolvable:$true] %s31
      %37 = dma.hbm_to_vmem [thread:$0]  %s3, 256, %s32, [#allocation5], 128, 128, 8
    $region17: #{tpu_custom_call.1} parent=1 // pred_fallthru
      _
    // Predicated region
    $region18: #{tpu_custom_call.1} parent=1 // pred_check
      _
    $region19: #{tpu_custom_call.1} parent=1 // pred_check_branch
      %39 = sbr.rel (0) target = $region21
    $region20: #{tpu_custom_call.1} parent=1 // pred_region
      _
    $region21: #{tpu_custom_call.1} parent=1 // pred_fallthru
      _
    // Predicated region
    $region22: #{tpu_custom_call.1} parent=1 // pred_check
      _
    $region23: #{tpu_custom_call.1} parent=1 // pred_check_branch
      %41 = sbr.rel (0) target = $region25
    $region24: #{tpu_custom_call.1} parent=1 // pred_region
      %42 = dma.done [#allocation3], 128
    $region25: #{tpu_custom_call.1} parent=1 // pred_fallthru
      _
    // Predicated region
    $region26: #{tpu_custom_call.1} parent=1 // pred_check
      _
    $region27: #{tpu_custom_call.1} parent=1 // pred_check_branch
      %44 = sbr.rel (0) target = $region29
    $region28: #{tpu_custom_call.1} parent=1 // pred_region
      %45 = dma.done [#allocation5], 256
    $region29: #{tpu_custom_call.1} parent=1 // pred_fallthru
      _
    %v46 = vld [vmem:[#allocation2] sm:$0xff]
    %v47 = vld [vmem:[%s1] sm:$0xff]
    %v48 = vld [vmem:[%s1 + $0x8] sm:$0xff]
    %v49 = vld [vmem:[%s2] sm:$0x1]
    %v51 = vlaneseq
    %v52 = vshrl.u32 %v51, 7
    %v53 = vsub.s32 0, %v52
    %v54 = vrot.slane %v49, %v53
    %vm56 = vcmask 130048
    %v58 = vsel %vm56, %v46, 0
    %60 = vmatprep.subr.mxu0 0.0
    %61 = vmatpush1.msra.mxu0 %v47
    %62 = vmatprep.subr.mxu0 0.0
    %63 = vmatpush1.msra.mxu0 %v48
    %64 = vmatprep.subr.mxu0 0.0
    %65 = vmatpush1.msra.mxu0 0.0
    %66 = vmatprep.subr.mxu0 0.0
    %67 = vmatpush1.msra.mxu0 0.0
    %68 = vmatprep.subr.mxu0 0.0
    %69 = vmatpush1.msra.mxu0 0.0
    %70 = vmatprep.subr.mxu0 0.0
    %71 = vmatpush1.msra.mxu0 0.0
    %72 = vmatprep.subr.mxu0 0.0
    %73 = vmatpush1.msra.mxu0 0.0
    %74 = vmatprep.subr.mxu0 0.0
    %75 = vmatpush1.msra.mxu0 0.0
    %76 = vmatprep.subr.mxu0 0.0
    %77 = vmatpush1.msra.mxu0 0.0
    %78 = vmatprep.subr.mxu0 0.0
    %79 = vmatpush1.msra.mxu0 0.0
    %80 = vmatprep.subr.mxu0 0.0
    %81 = vmatpush1.msra.mxu0 0.0
    %82 = vmatprep.subr.mxu0 0.0
    %83 = vmatpush1.msra.mxu0 0.0
    %84 = vmatprep.subr.mxu0 0.0
    %85 = vmatpush1.msra.mxu0 0.0
    %86 = vmatprep.subr.mxu0 0.0
    %87 = vmatpush1.msra.mxu0 0.0
    %88 = vmatprep.subr.mxu0 0.0
    %89 = vmatpush1.msra.mxu0 0.0
    %90 = vmatprep.subr.mxu0 0.0
    %91 = vmatpush1.msra.mxu0 0.0
    %92 = vmatprep.subr.mxu0 0.0
    %93 = vmatpush1.msra.mxu0 0.0
    %94 = vmatprep.subr.mxu0 0.0
    %95 = vmatpush1.msra.mxu0 0.0
    %96 = vmatprep.subr.mxu0 0.0
    %97 = vmatpush1.msra.mxu0 0.0
    %98 = vmatprep.subr.mxu0 0.0
    %99 = vmatpush1.msra.mxu0 0.0
    %100 = vmatprep.subr.mxu0 0.0
    %101 = vmatpush1.msra.mxu0 0.0
    %102 = vmatprep.subr.mxu0 0.0
    %103 = vmatpush1.msra.mxu0 0.0
    %104 = vmatprep.subr.mxu0 0.0
    %105 = vmatpush1.msra.mxu0 0.0
    %106 = vmatprep.subr.mxu0 0.0
    %107 = vmatpush1.msra.mxu0 0.0
    %108 = vmatprep.subr.mxu0 0.0
    %109 = vmatpush1.msra.mxu0 0.0
    %110 = vmatprep.subr.mxu0 0.0
    %111 = vmatpush1.msra.mxu0 0.0
    %112 = vmatprep.subr.mxu0 0.0
    %113 = vmatpush1.msra.mxu0 0.0
    %114 = vmatprep.subr.mxu0 0.0
    %115 = vmatpush1.msra.mxu0 0.0
    %116 = vmatprep.subr.mxu0 0.0
    %117 = vmatpush1.msra.mxu0 0.0
    %118 = vmatprep.subr.mxu0 0.0
    %119 = vmatpush1.msra.mxu0 0.0
    %120 = vmatprep.subr.mxu0 0.0
    %121 = vmatpush1.msra.mxu0 0.0
    %122 = vmatprep.subr.mxu0 0.0
    %123 = vmatpush1.msra.mxu0 0.0
    %124 = vmatprep.mubr.f32.mxu0 0.0
    %125 = vmatmul.mubr.f32.gmra.mrb[0].mxu0 %v58
    %v126 = vpop.f32.mrb[0].mxu0
    %v127 = vadd.f32 %v54, %v126
    %v128 = vpop.f32.mrb[0].mxu0
    %129 = vdwg.mxu0
    %v130 = vmax.f32 %v127, 0.0
    %v131 = vld [vmem:[#allocation4] sm:$0xff]
    %v132 = vld [vmem:[#allocation4 + $0x8] sm:$0xff]
    %v133 = vld [vmem:[%s4] sm:$0xff]
    %v134 = vld [vmem:[%s4 + $0x8] sm:$0xff]
    %136 = vset.pattern.permute.xlu0 0
    %137 = vperm.xlu0 %136, %v133
    %v138 = vpop.permute.xlu0 %137
    %141 = vset.pattern.permute.xlu0 0
    %142 = vperm.xlu0 %141, %v134
    %v143 = vpop.permute.xlu0 %142
    %vm145 = vcmask 261120
    %v147 = vsel %vm145, %v131, 0
    %v150 = vsel %vm145, %v132, 0
    %v153 = vsel %vm145, %v130, 0
    %155 = vmatprep.subr.mxu0 0.0
    %156 = vmatpush1.xpose.msra.mxu0 %v153
    %157 = vmatprep.subr.mxu0 0.0
    %158 = vmatpush1.xpose.msra.mxu0 0.0
    %159 = vmatprep.subr.mxu0 0.0
    %160 = vmatpush1.xpose.msra.mxu0 0.0
    %161 = vmatprep.subr.mxu0 0.0
    %162 = vmatpush1.xpose.msra.mxu0 0.0
    %163 = vmatprep.subr.mxu0 0.0
    %164 = vmatpush1.xpose.msra.mxu0 0.0
    %165 = vmatprep.subr.mxu0 0.0
    %166 = vmatpush1.xpose.msra.mxu0 0.0
    %167 = vmatprep.subr.mxu0 0.0
    %168 = vmatpush1.xpose.msra.mxu0 0.0
    %169 = vmatprep.subr.mxu0 0.0
    %170 = vmatpush1.xpose.msra.mxu0 0.0
    %171 = vmatprep.subr.mxu0 0.0
    %172 = vmatpush1.xpose.msra.mxu0 0.0
    %173 = vmatprep.subr.mxu0 0.0
    %174 = vmatpush1.xpose.msra.mxu0 0.0
    %175 = vmatprep.subr.mxu0 0.0
    %176 = vmatpush1.xpose.msra.mxu0 0.0
    %177 = vmatprep.subr.mxu0 0.0
    %178 = vmatpush1.xpose.msra.mxu0 0.0
    %179 = vmatprep.subr.mxu0 0.0
    %180 = vmatpush1.xpose.msra.mxu0 0.0
    %181 = vmatprep.subr.mxu0 0.0
    %182 = vmatpush1.xpose.msra.mxu0 0.0
    %183 = vmatprep.subr.mxu0 0.0
    %184 = vmatpush1.xpose.msra.mxu0 0.0
    %185 = vmatprep.subr.mxu0 0.0
    %186 = vmatpush1.xpose.msra.mxu0 0.0
    %187 = vmatprep.subr.mxu0 0.0
    %188 = vmatpush1.xpose.msra.mxu0 0.0
    %189 = vmatprep.subr.mxu0 0.0
    %190 = vmatpush1.xpose.msra.mxu0 0.0
    %191 = vmatprep.subr.mxu0 0.0
    %192 = vmatpush1.xpose.msra.mxu0 0.0
    %193 = vmatprep.subr.mxu0 0.0
    %194 = vmatpush1.xpose.msra.mxu0 0.0
    %195 = vmatprep.subr.mxu0 0.0
    %196 = vmatpush1.xpose.msra.mxu0 0.0
    %197 = vmatprep.subr.mxu0 0.0
    %198 = vmatpush1.xpose.msra.mxu0 0.0
    %199 = vmatprep.subr.mxu0 0.0
    %200 = vmatpush1.xpose.msra.mxu0 0.0
    %201 = vmatprep.subr.mxu0 0.0
    %202 = vmatpush1.xpose.msra.mxu0 0.0
    %203 = vmatprep.subr.mxu0 0.0
    %204 = vmatpush1.xpose.msra.mxu0 0.0
    %205 = vmatprep.subr.mxu0 0.0
    %206 = vmatpush1.xpose.msra.mxu0 0.0
    %207 = vmatprep.subr.mxu0 0.0
    %208 = vmatpush1.xpose.msra.mxu0 0.0
    %209 = vmatprep.subr.mxu0 0.0
    %210 = vmatpush1.xpose.msra.mxu0 0.0
    %211 = vmatprep.subr.mxu0 0.0
    %212 = vmatpush1.xpose.msra.mxu0 0.0
    %213 = vmatprep.subr.mxu0 0.0
    %214 = vmatpush1.xpose.msra.mxu0 0.0
    %215 = vmatprep.subr.mxu0 0.0
    %216 = vmatpush1.xpose.msra.mxu0 0.0
    %217 = vmatprep.subr.mxu0 0.0
    %218 = vmatpush1.xpose.msra.mxu0 0.0
    %219 = vmatprep.mubr.f32.mxu0 0.0
    %220 = vmatmul.mubr.f32.gmra.mrb[0].mxu0 %v147
    %v221 = vpop.f32.mrb[0].mxu0
    %v222 = vadd.f32 %v138, %v221
    %v223 = vpop.f32.mrb[0].mxu0
    %224 = vmatprep.mubr.f32.mxu0 0.0
    %225 = vmatmul.mubr.f32.gmra.mrb[0].mxu0 %v150
    %v226 = vpop.f32.mrb[0].mxu0
    %v227 = vadd.f32 %v143, %v226
    %v228 = vpop.f32.mrb[0].mxu0
    %229 = vdwg.mxu0
    %v230 = vlaneseq
    %v231 = vshrl.u32 %v230, 7
    %v232 = vadd.s32 %v231, 8
    %vm233 = vcmp.lt.s32.totalorder %v231, 8
    %vm234 = vcmp.lt.s32.totalorder %v232, 8
    %v235 = vsel %vm233, 1, 0
    %v236 = vsel %vm234, 1, 0
    %vm237 = vcmp.eq.s32.totalorder %v235, 1
    %vm238 = vcmp.eq.s32.totalorder %v236, 1
    %v239 = vsel %vm237, %v222, 0.0
    %v240 = vsel %vm238, %v227, 0.0
    %vm241 = vcmask 64512
    %v242 = vsel %vm241, %v239, 0.0
    %v243 = vsel %vm241, %v240, 0.0
    %v244 = vadd.f32 %v242, %v243
    %v245 = vrot.slane %v244, 4
    %v246 = vadd.f32 %v244, %v245
    %v247 = vrot.slane %v246, 2
    %v248 = vadd.f32 %v246, %v247
    %v249 = vrot.slane %v248, 1
    %v250 = vadd.f32 %v248, %v249
    %vm251 = vcmp.eq.s32.totalorder %v231, 8
    %vm252 = vcmp.eq.s32.totalorder %v232, 8
    %v253 = vsel %vm251, 1, 0
    %v254 = vsel %vm252, 1, 0
    %vm255 = vcmp.eq.s32.totalorder %v253, 1
    %vm256 = vcmp.eq.s32.totalorder %v254, 1
    %v257 = vsel %vm255, %v222, 0.0
    %v258 = vsel %vm256, %v227, 0.0
    %v259 = vsel %vm241, %v257, 0.0
    %v260 = vsel %vm241, %v258, 0.0
    %v261 = vadd.f32 %v259, %v260
    %v262 = vrot.slane %v261, 4
    %v263 = vadd.f32 %v261, %v262
    %v264 = vrot.slane %v263, 2
    %v265 = vadd.f32 %v263, %v264
    %v266 = vrot.slane %v265, 1
    %v267 = vadd.f32 %v265, %v266
    %v268 = vmul.f32 %v250, 0.125
    %v269 = vsub.f32 %v267, %v268
    %v270 = vadd.f32 %v222, %v269
    %v271 = vadd.f32 %v227, %v269
    %272 = vst.msk [vmem:[%s5] sm:$0xff] %vm241, %v270
    %273 = vst.msk [vmem:[%s5 + $0x8] sm:$0xff] %vm241, %v271
    // Predicated region
    $region30: #{tpu_custom_call.1} parent=1 // pred_check
      _
    $region31: #{tpu_custom_call.1} parent=1 // pred_check_branch
      %275 = sbr.rel (0) target = $region33
    $region32: #{tpu_custom_call.1} parent=1 // pred_region
      _
    $region33: #{tpu_custom_call.1} parent=1 // pred_fallthru
      _
    // Predicated region
    $region34: #{tpu_custom_call.1} parent=1 // pred_check
      _
    $region35: #{tpu_custom_call.1} parent=1 // pred_check_branch
      %277 = sbr.rel (0) target = $region37
    $region36: #{tpu_custom_call.1} parent=1 // pred_region
      _
    $region37: #{tpu_custom_call.1} parent=1 // pred_fallthru
      _
    %278 = vsyncpa [#allocation3], 1
    %279 = vsyncpa [#allocation5], 1

</llo_original>
